<compile_context>
chip_gen: v7x
topology: tpu7x:2x2x1
jax: 0.10.0
libtpu: 0.0.40
codegen_flags: <defaults>
</compile_context>

<pallas_src>
import functools

import jax
import jax.numpy as jnp
from jax.experimental import pallas as pl
from jax.experimental.pallas import tpu as pltpu


def _round_up(x: int, m: int) -> int:
    return ((x + m - 1) // m) * m


# ---------------------------------------------------------------------------
# Kernels
# ---------------------------------------------------------------------------
def _matmul_kernel(a_ref, b_ref, o_ref, acc_ref):
    """o = a @ b, accumulated in f32 over the k grid axis."""
    @pl.when(pl.program_id(2) == 0)
    def _init():
        acc_ref[...] = jnp.zeros_like(acc_ref)

    acc_ref[...] += jnp.dot(a_ref[...], b_ref[...],
                            preferred_element_type=jnp.float32)

    @pl.when(pl.program_id(2) == pl.num_programs(2) - 1)
    def _finalize():
        o_ref[...] = acc_ref[...].astype(o_ref.dtype)


def _matmul_bias_kernel(a_ref, b_ref, bias_ref, o_ref, acc_ref):
    """o = a @ b + bias; bias added only in the finalize epilogue."""
    @pl.when(pl.program_id(2) == 0)
    def _init():
        acc_ref[...] = jnp.zeros_like(acc_ref)

    acc_ref[...] += jnp.dot(a_ref[...], b_ref[...],
                            preferred_element_type=jnp.float32)

    @pl.when(pl.program_id(2) == pl.num_programs(2) - 1)
    def _finalize():
        o_ref[...] = (acc_ref[...] +
                      bias_ref[...].astype(jnp.float32)).astype(o_ref.dtype)


# ---------------------------------------------------------------------------
# Tiled matmul wrapper
# ---------------------------------------------------------------------------
def _tiled_matmul(a, b, bias=None, *, out_dtype, compute_dtype,
                  tm=512, tn=512, tk=512):
    """Padded, tiled, bf16/f32 MXU matmul: out = a @ b (+ bias)."""
    M, K = a.shape
    K2, N = b.shape
    assert K == K2, (a.shape, b.shape)

    # Pad to TPU-friendly shapes: rows -> multiple of 8, lanes/K -> 128.
    Mp = _round_up(M, 8)
    Kp = _round_up(K, 128)
    Np = _round_up(N, 128)
    # Clamp tiles to the (padded) problem, then make padded dims divisible.
    tm = min(tm, Mp)
    tk = min(tk, Kp)
    tn = min(tn, Np)
    Mp = _round_up(Mp, tm)
    Kp = _round_up(Kp, tk)
    Np = _round_up(Np, tn)

    a_p = jnp.pad(a.astype(compute_dtype), ((0, Mp - M), (0, Kp - K)))
    b_p = jnp.pad(b.astype(compute_dtype), ((0, Kp - K), (0, Np - N)))

    grid = (Mp // tm, Np // tn, Kp // tk)

    in_specs = [
        pl.BlockSpec((tm, tk), lambda i, j, k: (i, k)),
        pl.BlockSpec((tk, tn), lambda i, j, k: (k, j)),
    ]
    args = [a_p, b_p]
    kernel = _matmul_kernel
    if bias is not None:
        bias_p = jnp.pad(bias.astype(jnp.float32).reshape(1, N),
                         ((0, 0), (0, Np - N)))
        in_specs.append(pl.BlockSpec((1, tn), lambda i, j, k: (0, j)))
        args.append(bias_p)
        kernel = _matmul_bias_kernel

    out = pl.pallas_call(
        kernel,
        out_shape=jax.ShapeDtypeStruct((Mp, Np), out_dtype),
        grid_spec=pltpu.PrefetchScalarGridSpec(
            num_scalar_prefetch=0,
            grid=grid,
            in_specs=in_specs,
            out_specs=pl.BlockSpec((tm, tn), lambda i, j, k: (i, j)),
            scratch_shapes=[pltpu.VMEM((tm, tn), jnp.float32)],
        ),
        compiler_params=pltpu.CompilerParams(
            dimension_semantics=("parallel", "parallel", "arbitrary")),
    )(*args)

    return out[:M, :N]


# ---------------------------------------------------------------------------
# GCN forward
# ---------------------------------------------------------------------------
def gcn_forward(H, A, weight, bias=None, *, compute_dtype=jnp.bfloat16,
                tm=512, tn=512, tk=512):
    """Pallas equivalent of GCN.forward(H, A): A @ (H @ weight) [+ bias]."""
    N, in_f = H.shape
    in_f2, out_f = weight.shape
    assert in_f == in_f2 and A.shape == (N, N)
    out_dtype = H.dtype
    mm = functools.partial(_tiled_matmul, compute_dtype=compute_dtype,
                           tm=tm, tn=tn, tk=tk)

    # Choose ordering so the N^2-scaled matmul has the narrower inner width.
    if out_f <= in_f:
        hw = mm(H, weight, out_dtype=compute_dtype)          # (N, out_f), small
        return mm(A, hw, bias=bias, out_dtype=out_dtype)     # N^2 * out_f
    else:
        ah = mm(A, H, out_dtype=compute_dtype)               # N^2 * in_f
        return mm(ah, weight, bias=bias, out_dtype=out_dtype)


def init_gcn_params(key, in_features, out_features, bias=False):
    """Deterministic re-implementation of GCN.reset_parameters()."""
    # Faithful to the reference: stdv = 1.0 / out_features ** 1 / 2
    # (operator precedence makes this 1 / (2 * out_features), NOT 1/sqrt).
    stdv = 1.0 / out_features / 2.0
    kw, kb = jax.random.split(key)
    weight = jax.random.uniform(kw, (in_features, out_features),
                                minval=-stdv, maxval=stdv, dtype=jnp.float32)
    b = None
    if bias:
        b = jax.random.uniform(kb, (out_features,),
                               minval=-stdv, maxval=stdv, dtype=jnp.float32)
    return weight, b


if __name__ == "__main__":
    key = jax.random.PRNGKey(0)
    k_h1, k_a1, k_p1, k_h2, k_a2, k_p2 = jax.random.split(key, 6)

    # ---- Case 1: out_f > in_f  ->  (A @ H) @ W ordering, no bias, f32 ----
    N1, in_f1, out_f1 = 256, 48, 160
    H1 = jax.random.normal(k_h1, (N1, in_f1), dtype=jnp.float32)
    A1 = jax.random.normal(k_a1, (N1, N1), dtype=jnp.float32)
    W1, b1 = init_gcn_params(k_p1, in_f1, out_f1, bias=False)

    out1 = gcn_forward(H1, A1, W1, b1, compute_dtype=jnp.float32,
                       tm=128, tn=128, tk=128)   # small tiles -> multi-step grid
    out1 = jax.block_until_ready(out1)
    ref1 = A1 @ (H1 @ W1)
    assert out1.shape == ref1.shape
    assert jnp.allclose(out1, ref1, atol=2e-3, rtol=2e-3), "case1 f32 mismatch"

    # ---- Case 2: out_f < in_f  ->  A @ (H @ W) ordering, with bias, f32 ----
    N2, in_f2_, out_f2 = 256, 96, 40
    H2 = jax.random.normal(k_h2, (N2, in_f2_), dtype=jnp.float32)
    A2 = jax.random.normal(k_a2, (N2, N2), dtype=jnp.float32)
    W2, b2 = init_gcn_params(k_p2, in_f2_, out_f2, bias=True)

    out2 = gcn_forward(H2, A2, W2, b2, compute_dtype=jnp.float32,
                       tm=128, tn=128, tk=128)
    out2 = jax.block_until_ready(out2)
    ref2 = A2 @ (H2 @ W2) + b2
    assert out2.shape == ref2.shape
    assert jnp.allclose(out2, ref2, atol=2e-3, rtol=2e-3), "case2 bias mismatch"

    # ---- Case 3: default bf16 compute path (default 512 tiles) ----
    out3 = gcn_forward(H1, A1, W1, None)   # compute_dtype=bf16 by default
    out3 = jax.block_until_ready(out3)
    assert out3.shape == ref1.shape
    assert jnp.allclose(out3, ref1, atol=1e-1, rtol=1e-1), "case3 bf16 mismatch"

    print("KERNEL_OK")
</pallas_src>

<mosaic_0001>
module attributes {stable_mosaic.version = 11 : i64} {
  func.func @_matmul_kernel(%arg0: i32, %arg1: i32, %arg2: i32, %arg3: memref<128x128xf32, #tpu.memory_space<vmem>>, %arg4: memref<128x128xf32, #tpu.memory_space<vmem>>, %arg5: memref<128x128xf32, #tpu.memory_space<vmem>>, %arg6: memref<128x128xf32, #tpu.memory_space<vmem>>) attributes {dimension_semantics = [#tpu.dimension_semantics<parallel>, #tpu.dimension_semantics<parallel>, #tpu.dimension_semantics<arbitrary>], iteration_bounds = array<i64: 2, 1, 2>, scalar_prefetch = 0 : i64, scratch_operands = 1 : i64, tpu.core_type = #tpu.core_type<tc>, window_params = [{transform_indices = @transform_0, window_bounds = array<i64: 128, 128>}, {transform_indices = @transform_1, window_bounds = array<i64: 128, 128>}, {transform_indices = @transform_2, window_bounds = array<i64: 128, 128>}]} {
    %c0_i32 = arith.constant 0 : i32
    %0 = arith.cmpi eq, %arg2, %c0_i32 : i32
    %1 = arith.extui %0 : i1 to i32
    %c0_i32_0 = arith.constant 0 : i32
    %2 = arith.cmpi ne, %1, %c0_i32_0 : i32
    scf.if %2 {
      %cst_9 = arith.constant 0.000000e+00 : f32
      %12 = vector.broadcast %cst_9 : f32 to vector<128x128xf32>
      %c0_10 = arith.constant 0 : index
      %c0_11 = arith.constant 0 : index
      %13 = vector.load %arg6[%c0_10, %c0_11] : memref<128x128xf32, #tpu.memory_space<vmem>>, vector<128x128xf32>
      tpu.vector_store %arg6[%c0_10, %c0_11], %12 {strides = array<i32>} : memref<128x128xf32, #tpu.memory_space<vmem>>, vector<128x128xf32>,
    } else {
    }
    %c0 = arith.constant 0 : index
    %c0_1 = arith.constant 0 : index
    %3 = vector.load %arg6[%c0, %c0_1] : memref<128x128xf32, #tpu.memory_space<vmem>>, vector<128x128xf32>
    %c0_2 = arith.constant 0 : index
    %c0_3 = arith.constant 0 : index
    %4 = vector.load %arg3[%c0_2, %c0_3] : memref<128x128xf32, #tpu.memory_space<vmem>>, vector<128x128xf32>
    %c0_4 = arith.constant 0 : index
    %c0_5 = arith.constant 0 : index
    %5 = vector.load %arg4[%c0_4, %c0_5] : memref<128x128xf32, #tpu.memory_space<vmem>>, vector<128x128xf32>
    %cst = arith.constant dense<0.000000e+00> : vector<128x128xf32>
    %6 = tpu.matmul %4, %5, %cst {dimension_numbers = #tpu.dot_dimension_numbers<[1], [0], [0], [1], [0, 0, 1, 1], [], []>} : vector<128x128xf32>, vector<128x128xf32>, vector<128x128xf32> -> vector<128x128xf32>
    %7 = arith.addf %3, %6 : vector<128x128xf32>
    %c0_6 = arith.constant 0 : index
    %c0_7 = arith.constant 0 : index
    %8 = vector.load %arg6[%c0_6, %c0_7] : memref<128x128xf32, #tpu.memory_space<vmem>>, vector<128x128xf32>
    tpu.vector_store %arg6[%c0_6, %c0_7], %7 {strides = array<i32>} : memref<128x128xf32, #tpu.memory_space<vmem>>, vector<128x128xf32>,
    %c1_i32 = arith.constant 1 : i32
    %9 = arith.cmpi eq, %arg2, %c1_i32 : i32
    %10 = arith.extui %9 : i1 to i32
    %c0_i32_8 = arith.constant 0 : i32
    %11 = arith.cmpi ne, %10, %c0_i32_8 : i32
    scf.if %11 {
      %c0_9 = arith.constant 0 : index
      %c0_10 = arith.constant 0 : index
      %12 = vector.load %arg6[%c0_9, %c0_10] : memref<128x128xf32, #tpu.memory_space<vmem>>, vector<128x128xf32>
      %c0_11 = arith.constant 0 : index
      %c0_12 = arith.constant 0 : index
      %13 = vector.load %arg5[%c0_11, %c0_12] : memref<128x128xf32, #tpu.memory_space<vmem>>, vector<128x128xf32>
      tpu.vector_store %arg5[%c0_11, %c0_12], %12 {strides = array<i32>} : memref<128x128xf32, #tpu.memory_space<vmem>>, vector<128x128xf32>,
    } else {
    }
    return
  }
  func.func @transform_0(%arg0: i32, %arg1: i32, %arg2: i32) -> (i32, i32) {
    %c0_i32 = arith.constant 0 : i32
    return %arg0, %arg2 : i32, i32
  }
  func.func @transform_1(%arg0: i32, %arg1: i32, %arg2: i32) -> (i32, i32) {
    %c0_i32 = arith.constant 0 : i32
    return %arg2, %arg1 : i32, i32
  }
  func.func @transform_2(%arg0: i32, %arg1: i32, %arg2: i32) -> (i32, i32) {
    %c0_i32 = arith.constant 0 : i32
    return %arg0, %arg1 : i32, i32
  }
}

</mosaic_0001>

<llo_original>
// kernel: tpu_custom_call.1
$region0: #{tpu_custom_call.1}
  #allocation0 [shape = 'u32[]', space=smem, size = 0x4, offset = 0x4, fixed_abs, tag = 'smem constant byte address 0x4 - core index']
  #allocation1 [shape = 'u32[144,128]{1,0:T(1,128)}', space=vmem, size = 0x12000, scoped, tag = 'internal scratch']
  #allocation2 [shape = 'f32[128,128]{1,0:T(8,128)}', space=vmem, size = 0x10000, scoped, tag = 'scratch operand']
  %s0 = inlined_call_operand.hbm [shape: f32[256,256], index: 0, kind: input, shape index: {}]
  %s1 = inlined_call_operand.hbm [shape: f32[256,128], index: 1, kind: input, shape index: {}]
  %s2 = inlined_call_operand.hbm [shape: f32[256,128], index: 2, kind: output, shape index: {}]
  %s3 = sld [smem:[#allocation0]]
  $region57: #{tpu_custom_call.1} parent=0
    _
  %s5 = ssub.s32 1, %s3
  %s6 = scalar_select 0, %s5, %s3
  $region1: #{tpu_custom_call.1} parent=0
    #allocation3 [shape = 'u8[131072]{0}', space=vmem, size = 0x20000, scoped, tag = 'input window, operand 0']
    #allocation4 [shape = 's32[2]{0}', space=sflag, size = 0x8, scoped, tag = 'scoped memory for tpu_custom_call.1']
    #allocation5 [shape = 's32[2]{0}', space=sflag, size = 0x8, scoped, tag = 'scoped memory for tpu_custom_call.1']
    #allocation6 [shape = 'u8[131072]{0}', space=vmem, size = 0x20000, scoped, tag = 'input window, operand 1']
    #allocation7 [shape = 's32[2]{0}', space=sflag, size = 0x8, scoped, tag = 'scoped memory for tpu_custom_call.1']
    #allocation8 [shape = 'u8[131072]{0}', space=vmem, size = 0x20000, scoped, tag = 'output window, operand 0']
    %7 = vsyncpa [#allocation4], 0
    %s8 = scalar_lea.sflag [#allocation4], 1
    %9 = vsyncpa %s8, 0
    %10 = vsyncpa [#allocation7], 0
    %s11 = scalar_lea.sflag [#allocation7], 1
    %12 = vsyncpa %s11, 0
    %13 = vsyncpa [#allocation5], 0
    %s14 = scalar_lea.sflag [#allocation5], 1
    %15 = vsyncpa %s14, 0
    loop: start=0, step=1, limit=6
    $region2: #{tpu_custom_call.1} parent=1 // loop_pre_header
      _
    $region3: #{tpu_custom_call.1} parent=1 // loop_header
      %s17 = sphi 0, %s21
      %p18 = scmp.ge.s32.totalorder %s17, 6
      %s24 = sphi 0, %s43
      %s25 = sphi 0, %s39
      %s26 = sphi 0, %s35
      %s27 = sphi 0, %s24
      %s28 = sphi 0, %s25
      %s29 = sphi 0, %s26
      %s30 = sphi 0, %s27
      %s31 = sphi 0, %s28
      %s32 = sphi 0, %s29
      %s48 = sphi 0, %s50
      %s51 = sphi 0, %s48
      %s52 = sphi 0, %s51
      %s68 = sphi 0, %s52
      %s76 = sphi 0, %s78
      %s79 = sphi 0, %s76
      %s80 = sphi 0, %s79
      %s96 = sphi 0, %s80
      %s104 = sphi 0, %s106
      %s107 = sphi 0, %s104
      %s108 = sphi 0, %s107
      %s124 = sphi 0, %s108
    $region4: #{tpu_custom_call.1} parent=1 // loop_header_branch
      %20 = sbr.rel (%p18) target = $region8
    $region5: #{tpu_custom_call.1} parent=1 // loop_body
      %s22 = ssub.s32 %s17, 1
      %s23 = ssub.s32 %s17, 2
      %s33 = sadd.s32 1, %s26
      %p34 = scmp.ge.s32.totalorder %s33, 2
      %s35 = scalar_select %p34, 0, %s33
      %s36 = sadd.s32 1, %s25
      %s37 = scalar_select %p34, %s36, %s25
      %p38 = scmp.ge.s32.totalorder %s37, 1
      %s39 = scalar_select %p38, 0, %s37
      %s40 = sadd.s32 1, %s24
      %s41 = scalar_select %p38, %s40, %s24
      %p42 = scmp.ge.s32.totalorder %s41, 2
      %s43 = scalar_select %p42, 0, %s41
      %s44 = ssub.s32 %s24, %s43
      %s45 = ssub.s32 %s26, %s35
      %s46 = sor.u32 %s44, %s45
      %p47 = scmp.eq.s32.totalorder %s46, 0
      %s49 = sadd.s32 %s48, 1
      %s50 = scalar_select %p47, %s48, %s49
      %p53 = pneg %p47
      %p54 = scmp.eq.s32.totalorder %s17, 3
      %p55 = por %p53, %p54
      %p56 = scmp.ne.s32.totalorder %s48, %s51
      %p57 = scmp.eq.s32.totalorder %s17, 0
      %p58 = por %p56, %p57
      %p59 = scmp.ne.s32.totalorder %s48, %s51
      %p60 = scmp.eq.s32.totalorder %s22, 3
      %p61 = por %p59, %p60
      %p62 = scmp.ne.s32.totalorder %s51, %s52
      %p63 = scmp.eq.s32.totalorder %s22, 0
      %p64 = por %p62, %p63
      %p65 = scmp.ne.s32.totalorder %s51, %s52
      %p66 = scmp.eq.s32.totalorder %s23, 3
      %p67 = por %p65, %p66
      %p69 = scmp.ne.s32.totalorder %s52, %s68
      %p70 = scmp.eq.s32.totalorder %s23, 0
      %p71 = por %p69, %p70
      %s72 = ssub.s32 %s26, %s35
      %s73 = ssub.s32 %s25, %s39
      %s74 = sor.u32 %s72, %s73
      %p75 = scmp.eq.s32.totalorder %s74, 0
      %s77 = sadd.s32 %s76, 1
      %s78 = scalar_select %p75, %s76, %s77
      %p81 = pneg %p75
      %p82 = scmp.eq.s32.totalorder %s17, 3
      %p83 = por %p81, %p82
      %p84 = scmp.ne.s32.totalorder %s76, %s79
      %p85 = scmp.eq.s32.totalorder %s17, 0
      %p86 = por %p84, %p85
      %p87 = scmp.ne.s32.totalorder %s76, %s79
      %p88 = scmp.eq.s32.totalorder %s22, 3
      %p89 = por %p87, %p88
      %p90 = scmp.ne.s32.totalorder %s79, %s80
      %p91 = scmp.eq.s32.totalorder %s22, 0
      %p92 = por %p90, %p91
      %p93 = scmp.ne.s32.totalorder %s79, %s80
      %p94 = scmp.eq.s32.totalorder %s23, 3
      %p95 = por %p93, %p94
      %p97 = scmp.ne.s32.totalorder %s80, %s96
      %p98 = scmp.eq.s32.totalorder %s23, 0
      %p99 = por %p97, %p98
      %s100 = ssub.s32 %s24, %s43
      %s101 = ssub.s32 %s25, %s39
      %s102 = sor.u32 %s100, %s101
      %p103 = scmp.eq.s32.totalorder %s102, 0
      %s105 = sadd.s32 %s104, 1
      %s106 = scalar_select %p103, %s104, %s105
      %p109 = pneg %p103
      %p110 = scmp.eq.s32.totalorder %s17, 3
      %p111 = por %p109, %p110
      %p112 = scmp.ne.s32.totalorder %s104, %s107
      %p113 = scmp.eq.s32.totalorder %s17, 0
      %p114 = por %p112, %p113
      %p115 = scmp.ne.s32.totalorder %s104, %s107
      %p116 = scmp.eq.s32.totalorder %s22, 3
      %p117 = por %p115, %p116
      %p118 = scmp.ne.s32.totalorder %s107, %s108
      %p119 = scmp.eq.s32.totalorder %s22, 0
      %p120 = por %p118, %p119
      %p121 = scmp.ne.s32.totalorder %s107, %s108
      %p122 = scmp.eq.s32.totalorder %s23, 3
      %p123 = por %p121, %p122
      %p125 = scmp.ne.s32.totalorder %s108, %s124
      %p126 = scmp.eq.s32.totalorder %s23, 0
      %p127 = por %p125, %p126
      %p128 = scmp.le.s32.totalorder 1, %s17
      %p129 = scmp.lt.s32.totalorder %s17, 5
      %p130 = pnand %p128, %p129
      %p131 = pneg %p130
      // Predicated region
      $region9: #{tpu_custom_call.1} parent=5 // pred_check
        _
      $region10: #{tpu_custom_call.1} parent=5 // pred_check_branch
        %133 = sbr.rel (%p130) target = $region12
      $region11: #{tpu_custom_call.1} parent=5 // pred_region
        %s134 = ssub.s32 %s17, 1
      $region12: #{tpu_custom_call.1} parent=5 // pred_fallthru
        _
      %p135 = scmp.lt.s32.totalorder %s17, 4
      // Predicated region
      $region13: #{tpu_custom_call.1} parent=5 // pred_check
        %p136 = pneg %p135
      $region14: #{tpu_custom_call.1} parent=5 // pred_check_branch
        %138 = sbr.rel (%p136) target = $region16
      $region15: #{tpu_custom_call.1} parent=5 // pred_region
        // Predicated region
        $region17: #{tpu_custom_call.1} parent=15 // pred_check
          %p139 = pneg %p58
        $region18: #{tpu_custom_call.1} parent=15 // pred_check_branch
          %141 = sbr.rel (%p139) target = $region20
        $region19: #{tpu_custom_call.1} parent=15 // pred_region
          %s142 = sand.u32 %s48, 1
          %s143 = scalar_lea.sflag [#allocation4], %s142
          %s144 = sand.u32 %s48, 1
          %s145 = smul.addr %s144, 128
          %s146 = scalar_lea.vmem [#allocation3], %s145
          %s147 = smul.u32 16, %s24
          %s149 = ssub.s32 2048, 2048
          %150 = vsyncadd %s143, %s149
          %s151 = smul.addr %s147, 2
          %s152 = sadd.s32 %s26, %s151
          %s153 = smul.addr %s152, 128
          %s154 = scalar_lea.hbm %s0, %s153
          %s155 = sshll.u32 %s146, 4
          %s156 = int_to_ptr.vmem [resolvable:$true] %s155
          %161 = dma.hbm_to_vmem [thread:$0]  %s154, 2048, %s156, %s143, 256, 128, 8
        $region20: #{tpu_custom_call.1} parent=15 // pred_fallthru
          _
        // Predicated region
        $region21: #{tpu_custom_call.1} parent=15 // pred_check
          %p162 = pneg %p86
        $region22: #{tpu_custom_call.1} parent=15 // pred_check_branch
          %164 = sbr.rel (%p162) target = $region24
        $region23: #{tpu_custom_call.1} parent=15 // pred_region
          %s165 = sand.u32 %s76, 1
          %s166 = scalar_lea.sflag [#allocation7], %s165
          %s167 = sand.u32 %s76, 1
          %s168 = smul.addr %s167, 128
          %s169 = scalar_lea.vmem [#allocation6], %s168
          %s170 = smul.u32 16, %s26
          %s172 = ssub.s32 2048, 2048
          %173 = vsyncadd %s166, %s172
          %s174 = sadd.s32 %s25, %s170
          %s175 = smul.addr %s174, 128
          %s176 = scalar_lea.hbm %s1, %s175
          %s177 = sshll.u32 %s169, 4
          %s178 = int_to_ptr.vmem [resolvable:$true] %s177
          %183 = dma.hbm_to_vmem [thread:$0]  %s176, 2048, %s178, %s166, 128, 128, 8
        $region24: #{tpu_custom_call.1} parent=15 // pred_fallthru
          _
      $region16: #{tpu_custom_call.1} parent=5 // pred_fallthru
        _
      %p184 = scmp.le.s32.totalorder 1, %s17
      %p185 = scmp.lt.s32.totalorder %s17, 5
      %p186 = pnand %p184, %p185
      %p187 = pneg %p186
      // Predicated region
      $region25: #{tpu_custom_call.1} parent=5 // pred_check
        _
      $region26: #{tpu_custom_call.1} parent=5 // pred_check_branch
        %189 = sbr.rel (%p186) target = $region28
      $region27: #{tpu_custom_call.1} parent=5 // pred_region
        %s190 = ssub.s32 %s17, 1
        %s191 = sand.u32 %s51, 1
        %s192 = scalar_lea.sflag [#allocation4], %s191
        %s193 = sand.u32 %s51, 1
        %s194 = smul.addr %s193, 128
        %s195 = scalar_lea.vmem [#allocation3], %s194
        // Predicated region
        $region29: #{tpu_custom_call.1} parent=27 // pred_check
          %p196 = pneg %p64
        $region30: #{tpu_custom_call.1} parent=27 // pred_check_branch
          %198 = sbr.rel (%p196) target = $region32
        $region31: #{tpu_custom_call.1} parent=27 // pred_region
          %199 = dma.done %s192, 2048
        $region32: #{tpu_custom_call.1} parent=27 // pred_fallthru
          _
        %s200 = sand.u32 %s79, 1
        %s201 = scalar_lea.sflag [#allocation7], %s200
        %s202 = sand.u32 %s79, 1
        %s203 = smul.addr %s202, 128
        %s204 = scalar_lea.vmem [#allocation6], %s203
        // Predicated region
        $region33: #{tpu_custom_call.1} parent=27 // pred_check
          %p205 = pneg %p92
        $region34: #{tpu_custom_call.1} parent=27 // pred_check_branch
          %207 = sbr.rel (%p205) target = $region36
        $region35: #{tpu_custom_call.1} parent=27 // pred_region
          %208 = dma.done %s201, 2048
        $region36: #{tpu_custom_call.1} parent=27 // pred_fallthru
          _
        %s209 = sand.u32 %s51, 1
        %s210 = scalar_lea.sflag [#allocation4], %s209
        %s211 = sand.u32 %s51, 1
        %s212 = smul.addr %s211, 128
        %s213 = scalar_lea.vmem [#allocation3], %s212
        %p214 = pneg %p64
        %p215 = pneg %p61
        %s216 = sand.u32 %s79, 1
        %s217 = scalar_lea.sflag [#allocation7], %s216
        %s218 = sand.u32 %s79, 1
        %s219 = smul.addr %s218, 128
        %s220 = scalar_lea.vmem [#allocation6], %s219
        %p221 = pneg %p92
        %p222 = pneg %p89
        %p223 = pneg %p120
        %p224 = pneg %p117
        %s225 = sand.u32 %s107, 1
        %s226 = scalar_lea.sflag [#allocation5], %s225
        %s227 = sand.u32 %s107, 1
        %s228 = smul.addr %s227, 128
        %s229 = scalar_lea.vmem [#allocation8], %s228
        %s230 = smul.u32 16, %s27
        %s231 = smul.u32 16, %s29
        %s232 = smul.u32 16, %s27
        %p233 = scmp.eq.s32.totalorder %s29, 0
        // Predicated region
        $region37: #{tpu_custom_call.1} parent=27 // pred_check
          %p234 = pneg %p233
        $region38: #{tpu_custom_call.1} parent=27 // pred_check_branch
          %236 = sbr.rel (%p234) target = $region40
        $region39: #{tpu_custom_call.1} parent=27 // pred_region
          %237 = vst [vmem:[#allocation2] sm:$0xff] 0.0
          %238 = vst [vmem:[#allocation2 + $0x8] sm:$0xff] 0.0
          %239 = vst [vmem:[#allocation2 + $0x10] sm:$0xff] 0.0
          %240 = vst [vmem:[#allocation2 + $0x18] sm:$0xff] 0.0
          %241 = vst [vmem:[#allocation2 + $0x20] sm:$0xff] 0.0
          %242 = vst [vmem:[#allocation2 + $0x28] sm:$0xff] 0.0
          %243 = vst [vmem:[#allocation2 + $0x30] sm:$0xff] 0.0
          %244 = vst [vmem:[#allocation2 + $0x38] sm:$0xff] 0.0
          %245 = vst [vmem:[#allocation2 + $0x40] sm:$0xff] 0.0
          %246 = vst [vmem:[#allocation2 + $0x48] sm:$0xff] 0.0
          %247 = vst [vmem:[#allocation2 + $0x50] sm:$0xff] 0.0
          %248 = vst [vmem:[#allocation2 + $0x58] sm:$0xff] 0.0
          %249 = vst [vmem:[#allocation2 + $0x60] sm:$0xff] 0.0
          %250 = vst [vmem:[#allocation2 + $0x68] sm:$0xff] 0.0
          %251 = vst [vmem:[#allocation2 + $0x70] sm:$0xff] 0.0
          %252 = vst [vmem:[#allocation2 + $0x78] sm:$0xff] 0.0
        $region40: #{tpu_custom_call.1} parent=27 // pred_fallthru
          _
        %v253 = vld [vmem:[#allocation2] sm:$0xff]
        %v254 = vld [vmem:[#allocation2 + $0x8] sm:$0xff]
        %v255 = vld [vmem:[#allocation2 + $0x10] sm:$0xff]
        %v256 = vld [vmem:[#allocation2 + $0x18] sm:$0xff]
        %v257 = vld [vmem:[#allocation2 + $0x20] sm:$0xff]
        %v258 = vld [vmem:[#allocation2 + $0x28] sm:$0xff]
        %v259 = vld [vmem:[#allocation2 + $0x30] sm:$0xff]
        %v260 = vld [vmem:[#allocation2 + $0x38] sm:$0xff]
        %v261 = vld [vmem:[#allocation2 + $0x40] sm:$0xff]
        %v262 = vld [vmem:[#allocation2 + $0x48] sm:$0xff]
        %v263 = vld [vmem:[#allocation2 + $0x50] sm:$0xff]
        %v264 = vld [vmem:[#allocation2 + $0x58] sm:$0xff]
        %v265 = vld [vmem:[#allocation2 + $0x60] sm:$0xff]
        %v266 = vld [vmem:[#allocation2 + $0x68] sm:$0xff]
        %v267 = vld [vmem:[#allocation2 + $0x70] sm:$0xff]
        %v268 = vld [vmem:[#allocation2 + $0x78] sm:$0xff]
        %v269 = vld [vmem:[%s195] sm:$0xff]
        %v270 = vld [vmem:[%s195 + $0x8] sm:$0xff]
        %v271 = vld [vmem:[%s195 + $0x10] sm:$0xff]
        %v272 = vld [vmem:[%s195 + $0x18] sm:$0xff]
        %v273 = vld [vmem:[%s195 + $0x20] sm:$0xff]
        %v274 = vld [vmem:[%s195 + $0x28] sm:$0xff]
        %v275 = vld [vmem:[%s195 + $0x30] sm:$0xff]
        %v276 = vld [vmem:[%s195 + $0x38] sm:$0xff]
        %v277 = vld [vmem:[%s195 + $0x40] sm:$0xff]
        %v278 = vld [vmem:[%s195 + $0x48] sm:$0xff]
        %v279 = vld [vmem:[%s195 + $0x50] sm:$0xff]
        %v280 = vld [vmem:[%s195 + $0x58] sm:$0xff]
        %v281 = vld [vmem:[%s195 + $0x60] sm:$0xff]
        %v282 = vld [vmem:[%s195 + $0x68] sm:$0xff]
        %v283 = vld [vmem:[%s195 + $0x70] sm:$0xff]
        %v284 = vld [vmem:[%s195 + $0x78] sm:$0xff]
        %v285 = vld [vmem:[%s204] sm:$0xff]
        %v286 = vld [vmem:[%s204 + $0x8] sm:$0xff]
        %v287 = vld [vmem:[%s204 + $0x10] sm:$0xff]
        %v288 = vld [vmem:[%s204 + $0x18] sm:$0xff]
        %v289 = vld [vmem:[%s204 + $0x20] sm:$0xff]
        %v290 = vld [vmem:[%s204 + $0x28] sm:$0xff]
        %v291 = vld [vmem:[%s204 + $0x30] sm:$0xff]
        %v292 = vld [vmem:[%s204 + $0x38] sm:$0xff]
        %v293 = vld [vmem:[%s204 + $0x40] sm:$0xff]
        %v294 = vld [vmem:[%s204 + $0x48] sm:$0xff]
        %v295 = vld [vmem:[%s204 + $0x50] sm:$0xff]
        %v296 = vld [vmem:[%s204 + $0x58] sm:$0xff]
        %v297 = vld [vmem:[%s204 + $0x60] sm:$0xff]
        %v298 = vld [vmem:[%s204 + $0x68] sm:$0xff]
        %v299 = vld [vmem:[%s204 + $0x70] sm:$0xff]
        %v300 = vld [vmem:[%s204 + $0x78] sm:$0xff]
        %301 = vmatprep.subr.mxu0 0.0
        %302 = vmatpush1.msra.mxu0 %v285
        %303 = vmatprep.subr.mxu0 0.0
        %304 = vmatpush1.msra.mxu0 %v286
        %305 = vmatprep.subr.mxu0 0.0
        %306 = vmatpush1.msra.mxu0 %v287
        %307 = vmatprep.subr.mxu0 0.0
        %308 = vmatpush1.msra.mxu0 %v288
        %309 = vmatprep.subr.mxu0 0.0
        %310 = vmatpush1.msra.mxu0 %v289
        %311 = vmatprep.subr.mxu0 0.0
        %312 = vmatpush1.msra.mxu0 %v290
        %313 = vmatprep.subr.mxu0 0.0
        %314 = vmatpush1.msra.mxu0 %v291
        %315 = vmatprep.subr.mxu0 0.0
        %316 = vmatpush1.msra.mxu0 %v292
        %317 = vmatprep.subr.mxu0 0.0
        %318 = vmatpush1.msra.mxu0 %v293
        %319 = vmatprep.subr.mxu0 0.0
        %320 = vmatpush1.msra.mxu0 %v294
        %321 = vmatprep.subr.mxu0 0.0
        %322 = vmatpush1.msra.mxu0 %v295
        %323 = vmatprep.subr.mxu0 0.0
        %324 = vmatpush1.msra.mxu0 %v296
        %325 = vmatprep.subr.mxu0 0.0
        %326 = vmatpush1.msra.mxu0 %v297
        %327 = vmatprep.subr.mxu0 0.0
        %328 = vmatpush1.msra.mxu0 %v298
        %329 = vmatprep.subr.mxu0 0.0
        %330 = vmatpush1.msra.mxu0 %v299
        %331 = vmatprep.subr.mxu0 0.0
        %332 = vmatpush1.msra.mxu0 %v300
        %333 = vmatprep.subr.mxu0 0.0
        %334 = vmatpush1.msra.mxu0 0.0
        %335 = vmatprep.subr.mxu0 0.0
        %336 = vmatpush1.msra.mxu0 0.0
        %337 = vmatprep.subr.mxu0 0.0
        %338 = vmatpush1.msra.mxu0 0.0
        %339 = vmatprep.subr.mxu0 0.0
        %340 = vmatpush1.msra.mxu0 0.0
        %341 = vmatprep.subr.mxu0 0.0
        %342 = vmatpush1.msra.mxu0 0.0
        %343 = vmatprep.subr.mxu0 0.0
        %344 = vmatpush1.msra.mxu0 0.0
        %345 = vmatprep.subr.mxu0 0.0
        %346 = vmatpush1.msra.mxu0 0.0
        %347 = vmatprep.subr.mxu0 0.0
        %348 = vmatpush1.msra.mxu0 0.0
        %349 = vmatprep.subr.mxu0 0.0
        %350 = vmatpush1.msra.mxu0 0.0
        %351 = vmatprep.subr.mxu0 0.0
        %352 = vmatpush1.msra.mxu0 0.0
        %353 = vmatprep.subr.mxu0 0.0
        %354 = vmatpush1.msra.mxu0 0.0
        %355 = vmatprep.subr.mxu0 0.0
        %356 = vmatpush1.msra.mxu0 0.0
        %357 = vmatprep.subr.mxu0 0.0
        %358 = vmatpush1.msra.mxu0 0.0
        %359 = vmatprep.subr.mxu0 0.0
        %360 = vmatpush1.msra.mxu0 0.0
        %361 = vmatprep.subr.mxu0 0.0
        %362 = vmatpush1.msra.mxu0 0.0
        %363 = vmatprep.subr.mxu0 0.0
        %364 = vmatpush1.msra.mxu0 0.0
        %365 = vmatprep.mubr.f32.mxu0 0.0
        %366 = vmatmul.mubr.f32.gmra.mrb[0].mxu0 %v269
        %v367 = vpop.f32.mrb[0].mxu0
        %v368 = vadd.f32 0.0, %v367
        %v369 = vpop.f32.mrb[0].mxu0
        %370 = vmatprep.mubr.f32.mxu0 0.0
        %371 = vmatmul.mubr.f32.gmra.mrb[0].mxu0 %v270
        %v372 = vpop.f32.mrb[0].mxu0
        %v373 = vadd.f32 0.0, %v372
        %v374 = vpop.f32.mrb[0].mxu0
        %375 = vmatprep.mubr.f32.mxu0 0.0
        %376 = vmatmul.mubr.f32.gmra.mrb[0].mxu0 %v271
        %v377 = vpop.f32.mrb[0].mxu0
        %v378 = vadd.f32 0.0, %v377
        %v379 = vpop.f32.mrb[0].mxu0
        %380 = vmatprep.mubr.f32.mxu0 0.0
        %381 = vmatmul.mubr.f32.gmra.mrb[0].mxu0 %v272
        %v382 = vpop.f32.mrb[0].mxu0
        %v383 = vadd.f32 0.0, %v382
        %v384 = vpop.f32.mrb[0].mxu0
        %385 = vmatprep.mubr.f32.mxu0 0.0
        %386 = vmatmul.mubr.f32.gmra.mrb[0].mxu0 %v273
        %v387 = vpop.f32.mrb[0].mxu0
        %v388 = vadd.f32 0.0, %v387
        %v389 = vpop.f32.mrb[0].mxu0
        %390 = vmatprep.mubr.f32.mxu0 0.0
        %391 = vmatmul.mubr.f32.gmra.mrb[0].mxu0 %v274
        %v392 = vpop.f32.mrb[0].mxu0
        %v393 = vadd.f32 0.0, %v392
        %v394 = vpop.f32.mrb[0].mxu0
        %395 = vmatprep.mubr.f32.mxu0 0.0
        %396 = vmatmul.mubr.f32.gmra.mrb[0].mxu0 %v275
        %v397 = vpop.f32.mrb[0].mxu0
        %v398 = vadd.f32 0.0, %v397
        %v399 = vpop.f32.mrb[0].mxu0
        %400 = vmatprep.mubr.f32.mxu0 0.0
        %401 = vmatmul.mubr.f32.gmra.mrb[0].mxu0 %v276
        %v402 = vpop.f32.mrb[0].mxu0
        %v403 = vadd.f32 0.0, %v402
        %v404 = vpop.f32.mrb[0].mxu0
        %405 = vmatprep.mubr.f32.mxu0 0.0
        %406 = vmatmul.mubr.f32.gmra.mrb[0].mxu0 %v277
        %v407 = vpop.f32.mrb[0].mxu0
        %v408 = vadd.f32 0.0, %v407
        %v409 = vpop.f32.mrb[0].mxu0
        %410 = vmatprep.mubr.f32.mxu0 0.0
        %411 = vmatmul.mubr.f32.gmra.mrb[0].mxu0 %v278
        %v412 = vpop.f32.mrb[0].mxu0
        %v413 = vadd.f32 0.0, %v412
        %v414 = vpop.f32.mrb[0].mxu0
        %415 = vmatprep.mubr.f32.mxu0 0.0
        %416 = vmatmul.mubr.f32.gmra.mrb[0].mxu0 %v279
        %v417 = vpop.f32.mrb[0].mxu0
        %v418 = vadd.f32 0.0, %v417
        %v419 = vpop.f32.mrb[0].mxu0
        %420 = vmatprep.mubr.f32.mxu0 0.0
        %421 = vmatmul.mubr.f32.gmra.mrb[0].mxu0 %v280
        %v422 = vpop.f32.mrb[0].mxu0
        %v423 = vadd.f32 0.0, %v422
        %v424 = vpop.f32.mrb[0].mxu0
        %425 = vmatprep.mubr.f32.mxu0 0.0
        %426 = vmatmul.mubr.f32.gmra.mrb[0].mxu0 %v281
        %v427 = vpop.f32.mrb[0].mxu0
        %v428 = vadd.f32 0.0, %v427
        %v429 = vpop.f32.mrb[0].mxu0
        %430 = vmatprep.mubr.f32.mxu0 0.0
        %431 = vmatmul.mubr.f32.gmra.mrb[0].mxu0 %v282
        %v432 = vpop.f32.mrb[0].mxu0
        %v433 = vadd.f32 0.0, %v432
        %v434 = vpop.f32.mrb[0].mxu0
        %435 = vmatprep.mubr.f32.mxu0 0.0
        %436 = vmatmul.mubr.f32.gmra.mrb[0].mxu0 %v283
        %v437 = vpop.f32.mrb[0].mxu0
        %v438 = vadd.f32 0.0, %v437
        %v439 = vpop.f32.mrb[0].mxu0
        %440 = vmatprep.mubr.f32.mxu0 0.0
        %441 = vmatmul.mubr.f32.gmra.mrb[0].mxu0 %v284
        %v442 = vpop.f32.mrb[0].mxu0
        %v443 = vadd.f32 0.0, %v442
        %v444 = vpop.f32.mrb[0].mxu0
        %445 = vdwg.mxu0
        %v446 = vadd.f32 %v253, %v368
        %v447 = vadd.f32 %v254, %v373
        %v448 = vadd.f32 %v255, %v378
        %v449 = vadd.f32 %v256, %v383
        %v450 = vadd.f32 %v257, %v388
        %v451 = vadd.f32 %v258, %v393
        %v452 = vadd.f32 %v259, %v398
        %v453 = vadd.f32 %v260, %v403
        %v454 = vadd.f32 %v261, %v408
        %v455 = vadd.f32 %v262, %v413
        %v456 = vadd.f32 %v263, %v418
        %v457 = vadd.f32 %v264, %v423
        %v458 = vadd.f32 %v265, %v428
        %v459 = vadd.f32 %v266, %v433
        %v460 = vadd.f32 %v267, %v438
        %v461 = vadd.f32 %v268, %v443
        %462 = vst [vmem:[#allocation2] sm:$0xff] %v446
        %463 = vst [vmem:[#allocation2 + $0x8] sm:$0xff] %v447
        %464 = vst [vmem:[#allocation2 + $0x10] sm:$0xff] %v448
        %465 = vst [vmem:[#allocation2 + $0x18] sm:$0xff] %v449
        %466 = vst [vmem:[#allocation2 + $0x20] sm:$0xff] %v450
        %467 = vst [vmem:[#allocation2 + $0x28] sm:$0xff] %v451
        %468 = vst [vmem:[#allocation2 + $0x30] sm:$0xff] %v452
        %469 = vst [vmem:[#allocation2 + $0x38] sm:$0xff] %v453
        %470 = vst [vmem:[#allocation2 + $0x40] sm:$0xff] %v454
        %471 = vst [vmem:[#allocation2 + $0x48] sm:$0xff] %v455
        %472 = vst [vmem:[#allocation2 + $0x50] sm:$0xff] %v456
        %473 = vst [vmem:[#allocation2 + $0x58] sm:$0xff] %v457
        %474 = vst [vmem:[#allocation2 + $0x60] sm:$0xff] %v458
        %475 = vst [vmem:[#allocation2 + $0x68] sm:$0xff] %v459
        %476 = vst [vmem:[#allocation2 + $0x70] sm:$0xff] %v460
        %477 = vst [vmem:[#allocation2 + $0x78] sm:$0xff] %v461
        %p478 = scmp.eq.s32.totalorder %s29, 1
        // Predicated region
        $region41: #{tpu_custom_call.1} parent=27 // pred_check
          %p479 = pneg %p478
        $region42: #{tpu_custom_call.1} parent=27 // pred_check_branch
          %481 = sbr.rel (%p479) target = $region44
        $region43: #{tpu_custom_call.1} parent=27 // pred_region
          %v482 = vld [vmem:[#allocation2] sm:$0xff]
          %v483 = vld [vmem:[#allocation2 + $0x8] sm:$0xff]
          %v484 = vld [vmem:[#allocation2 + $0x10] sm:$0xff]
          %v485 = vld [vmem:[#allocation2 + $0x18] sm:$0xff]
          %v486 = vld [vmem:[#allocation2 + $0x20] sm:$0xff]
          %v487 = vld [vmem:[#allocation2 + $0x28] sm:$0xff]
          %v488 = vld [vmem:[#allocation2 + $0x30] sm:$0xff]
          %v489 = vld [vmem:[#allocation2 + $0x38] sm:$0xff]
          %v490 = vld [vmem:[#allocation2 + $0x40] sm:$0xff]
          %v491 = vld [vmem:[#allocation2 + $0x48] sm:$0xff]
          %v492 = vld [vmem:[#allocation2 + $0x50] sm:$0xff]
          %v493 = vld [vmem:[#allocation2 + $0x58] sm:$0xff]
          %v494 = vld [vmem:[#allocation2 + $0x60] sm:$0xff]
          %v495 = vld [vmem:[#allocation2 + $0x68] sm:$0xff]
          %v496 = vld [vmem:[#allocation2 + $0x70] sm:$0xff]
          %v497 = vld [vmem:[#allocation2 + $0x78] sm:$0xff]
          %498 = vst [vmem:[%s229] sm:$0xff] %v482
          %499 = vst [vmem:[%s229 + $0x8] sm:$0xff] %v483
          %500 = vst [vmem:[%s229 + $0x10] sm:$0xff] %v484
          %501 = vst [vmem:[%s229 + $0x18] sm:$0xff] %v485
          %502 = vst [vmem:[%s229 + $0x20] sm:$0xff] %v486
          %503 = vst [vmem:[%s229 + $0x28] sm:$0xff] %v487
          %504 = vst [vmem:[%s229 + $0x30] sm:$0xff] %v488
          %505 = vst [vmem:[%s229 + $0x38] sm:$0xff] %v489
          %506 = vst [vmem:[%s229 + $0x40] sm:$0xff] %v490
          %507 = vst [vmem:[%s229 + $0x48] sm:$0xff] %v491
          %508 = vst [vmem:[%s229 + $0x50] sm:$0xff] %v492
          %509 = vst [vmem:[%s229 + $0x58] sm:$0xff] %v493
          %510 = vst [vmem:[%s229 + $0x60] sm:$0xff] %v494
          %511 = vst [vmem:[%s229 + $0x68] sm:$0xff] %v495
          %512 = vst [vmem:[%s229 + $0x70] sm:$0xff] %v496
          %513 = vst [vmem:[%s229 + $0x78] sm:$0xff] %v497
        $region44: #{tpu_custom_call.1} parent=27 // pred_fallthru
          _
        %s514 = sand.u32 %s107, 1
        %s515 = scalar_lea.sflag [#allocation5], %s514
        %s516 = sand.u32 %s107, 1
        %s517 = smul.addr %s516, 128
        %s518 = scalar_lea.vmem [#allocation8], %s517
        // Predicated region
        $region45: #{tpu_custom_call.1} parent=27 // pred_check
          %p519 = pneg %p117
        $region46: #{tpu_custom_call.1} parent=27 // pred_check_branch
          %521 = sbr.rel (%p519) target = $region48
        $region47: #{tpu_custom_call.1} parent=27 // pred_region
          %s522 = smul.u32 16, %s27
          %s524 = ssub.s32 2048, 2048
          %525 = vsyncadd %s515, %s524
          %s526 = sadd.s32 %s28, %s522
          %s527 = smul.addr %s526, 128
          %s528 = scalar_lea.hbm %s2, %s527
          %s529 = sshll.u32 %s518, 4
          %s530 = int_to_ptr.vmem [resolvable:$true] %s529
          %535 = dma.vmem_to_hbm [thread:$0]  %s530, 2048, %s528, %s515, 128, 128, 8
        $region48: #{tpu_custom_call.1} parent=27 // pred_fallthru
          _
      $region28: #{tpu_custom_call.1} parent=5 // pred_fallthru
        _
      %p536 = scmp.le.s32.totalorder 2, %s17
      // Predicated region
      $region49: #{tpu_custom_call.1} parent=5 // pred_check
        %p537 = pneg %p536
      $region50: #{tpu_custom_call.1} parent=5 // pred_check_branch
        %539 = sbr.rel (%p537) target = $region52
      $region51: #{tpu_custom_call.1} parent=5 // pred_region
        %s540 = ssub.s32 %s17, 2
        // Predicated region
        $region53: #{tpu_custom_call.1} parent=51 // pred_check
          %p541 = pneg %p123
        $region54: #{tpu_custom_call.1} parent=51 // pred_check_branch
          %543 = sbr.rel (%p541) target = $region56
        $region55: #{tpu_custom_call.1} parent=51 // pred_region
          %s544 = sand.u32 %s108, 1
          %s545 = scalar_lea.sflag [#allocation5], %s544
          %s546 = sand.u32 %s108, 1
          %s547 = smul.addr %s546, 128
          %s548 = scalar_lea.vmem [#allocation8], %s547
          %549 = dma.done %s545, 2048
        $region56: #{tpu_custom_call.1} parent=51 // pred_fallthru
          _
      $region52: #{tpu_custom_call.1} parent=5 // pred_fallthru
        _
    $region6: #{tpu_custom_call.1} parent=1 // loop_footer
      %s21 = sadd.s32 1, %s17
    $region7: #{tpu_custom_call.1} parent=1 // loop_footer_branch
      %16 = sbr.rel target = $region3
    $region8: #{tpu_custom_call.1} parent=1 // loop_exit
      _
    %550 = vsyncpa [#allocation4], 1
    %s551 = scalar_lea.sflag [#allocation4], 1
    %552 = vsyncpa %s551, 1
    %553 = vsyncpa [#allocation7], 1
    %s554 = scalar_lea.sflag [#allocation7], 1
    %555 = vsyncpa %s554, 1
    %556 = vsyncpa [#allocation5], 1
    %s557 = scalar_lea.sflag [#allocation5], 1
    %558 = vsyncpa %s557, 1

</llo_original>
